<compile_context>
chip_gen: v5e
topology: v5e:2x2
jax: 0.10.0
libtpu: 0.0.40
codegen_flags: <defaults>
</compile_context>

<pallas_src>
import functools

import jax
import jax.numpy as jnp
from jax.experimental import pallas as pl
from jax.experimental.pallas import tpu as pltpu


# ---------------------------------------------------------------------------
# Small helpers
# ---------------------------------------------------------------------------
def _round_up(x: int, m: int) -> int:
    return ((x + m - 1) // m) * m


def _vmem_capacity_bytes() -> int:
    """Per-TensorCore VMEM capacity, with a safe fallback."""
    try:
        kind = jax.devices()[0].device_kind.lower()
    except Exception:
        kind = ""
    if "v7" in kind:
        # v7x: 64 MiB per TensorCore (regardless of any per-chip number).
        return 64 * 1024 * 1024
    try:
        return int(pltpu.get_tpu_info().vmem_capacity_bytes)
    except Exception:
        pass
    # v5e / v6e default.
    return 128 * 1024 * 1024


def _choose_tiles(M: int, N: int, K: int, itemsize: int, vmem_cap: int):
    """Generation- and dtype-aware tile selection."""
    # Sublane packing: f32 -> 8, bf16 -> 16, int8/fp8 -> 32.
    m_align = 8 * max(1, 4 // itemsize)
    lane = 128

    if vmem_cap >= 96 * 1024 * 1024:
        # v5e / v6e: 128 MiB VMEM.  1024x2048 gives tm*tn/(tm+tn) ~ 683
        # (~683 FLOP/byte bf16), above the v6e crossover (~650).
        tm_t, tn_t, tk_t = 1024, 2048, 1024
        vmem_limit = 96 * 1024 * 1024
    else:
        # v7x: 64 MiB per TC, crossover ~310 FLOP/byte thanks to 3.2 TB/s HBM.
        # Keep double-buffered tiles + acc under ~30 MiB and leave headroom.
        tm_t, tn_t, tk_t = 512, 2048, 1024
        vmem_limit = 52 * 1024 * 1024

    tm = min(_round_up(M, m_align), tm_t)
    tn = min(_round_up(N, lane), tn_t)
    tk = min(_round_up(K, lane), tk_t)

    # v7x megacore: make sure the parallel grid extent is >= 2 when possible,
    # preferring a split along M (keeps tn lane-dense / roofline-sized).
    if pl.cdiv(M, tm) * pl.cdiv(N, tn) < 2:
        tm_half = (tm // 2 // m_align) * m_align
        if tm_half >= m_align and pl.cdiv(M, tm_half) >= 2:
            tm = tm_half

    return tm, tn, tk, vmem_limit


# ---------------------------------------------------------------------------
# Kernels:  out[i, j] = sum_k x[i, k] @ w[k, j] + b[j]
# ---------------------------------------------------------------------------
def _addmm_kernel_f32(x_ref, w_ref, b_ref, o_ref):
    """f32 output: accumulate directly into the resident output block."""
    k = pl.program_id(2)

    @pl.when(k == 0)
    def _init():
        o_ref[...] = jnp.zeros_like(o_ref)

    o_ref[...] += jnp.dot(
        x_ref[...], w_ref[...], preferred_element_type=jnp.float32
    )

    @pl.when(k == pl.num_programs(2) - 1)
    def _bias():
        o_ref[...] += b_ref[...].astype(o_ref.dtype)  # (1, tn) broadcasts


def _addmm_kernel_acc(x_ref, w_ref, b_ref, o_ref, acc_ref):
    """Narrow (bf16 etc.) output: f32 VMEM accumulator + downcast epilogue."""
    k = pl.program_id(2)

    @pl.when(k == 0)
    def _init():
        acc_ref[...] = jnp.zeros_like(acc_ref)

    # Native-dtype operands straight into the MXU; f32 accumulation.
    acc_ref[...] += jnp.dot(
        x_ref[...], w_ref[...], preferred_element_type=jnp.float32
    )

    @pl.when(k == pl.num_programs(2) - 1)
    def _finalize():
        out = acc_ref[...] + b_ref[...].astype(jnp.float32)
        o_ref[...] = out.astype(o_ref.dtype)


# ---------------------------------------------------------------------------
# Tiled addmm:  (M, K) @ (K, N) + (N,)
# ---------------------------------------------------------------------------
def linear_bias(x2d, w, b):
    M, K = x2d.shape
    K2, N = w.shape
    assert K == K2 and b.shape == (N,)

    dtype = x2d.dtype
    itemsize = jnp.dtype(dtype).itemsize
    vmem_cap = _vmem_capacity_bytes()
    tm, tn, tk, vmem_limit = _choose_tiles(M, N, K, itemsize, vmem_cap)

    # Zero-pad every dim up to a tile multiple (exact for the matmul: padded
    # K rows/cols are zero; padded M/N rows/cols are sliced off).  This keeps
    # every block aligned and sized as intended — no full-dim fallback blocks.
    Mp, Np, Kp = _round_up(M, tm), _round_up(N, tn), _round_up(K, tk)
    xp = jnp.pad(x2d, ((0, Mp - M), (0, Kp - K))) if (Mp, Kp) != (M, K) else x2d
    wp = jnp.pad(w, ((0, Kp - K), (0, Np - N))) if (Kp, Np) != (K, N) else w
    bp = (jnp.pad(b, (0, Np - N)) if Np != N else b).reshape(1, Np)

    grid = (Mp // tm, Np // tn, Kp // tk)

    out_is_f32 = dtype == jnp.float32
    if out_is_f32:
        kernel = _addmm_kernel_f32
        scratch = []          # accumulate straight into the resident o_ref tile
    else:
        kernel = _addmm_kernel_acc
        scratch = [pltpu.VMEM((tm, tn), jnp.float32)]

    cost = pl.CostEstimate(
        flops=2 * M * N * K,
        bytes_accessed=(M * K + K * N + M * N + N) * itemsize,
        transcendentals=0,
    )

    out_p = pl.pallas_call(
        kernel,
        out_shape=jax.ShapeDtypeStruct((Mp, Np), dtype),
        grid=grid,
        in_specs=[
            pl.BlockSpec((tm, tk), lambda i, j, k: (i, k)),   # x tile
            pl.BlockSpec((tk, tn), lambda i, j, k: (k, j)),   # w tile
            pl.BlockSpec((1, tn), lambda i, j, k: (0, j)),    # bias tile
        ],
        out_specs=pl.BlockSpec((tm, tn), lambda i, j, k: (i, j)),
        scratch_shapes=scratch,
        compiler_params=pltpu.CompilerParams(
            dimension_semantics=("parallel", "parallel", "arbitrary"),
            vmem_limit_bytes=vmem_limit,
        ),
        cost_estimate=cost,
    )(xp, wp, bp)

    if (Mp, Np) != (M, N):
        out_p = out_p[:M, :N]
    return out_p


# ---------------------------------------------------------------------------
# Conv1D.forward (rf == 1)
# ---------------------------------------------------------------------------
@functools.partial(jax.jit, static_argnames=())
def conv1d_forward(x, w, b):
    """x: (B, T, nx), w: (nx, nf), b: (nf,) -> (B, T, nf)."""
    B, T, nx = x.shape
    nf = w.shape[1]
    out = linear_bias(x.reshape(B * T, nx), w, b)
    return out.reshape(B, T, nf)


# ---------------------------------------------------------------------------
# Pure-JAX reference (mirrors torch.addmm) for correctness checking
# ---------------------------------------------------------------------------
def conv1d_reference(x, w, b):
    B, T, nx = x.shape
    nf = w.shape[1]
    out = x.reshape(B * T, nx) @ w + b
    return out.reshape(B, T, nf)


if __name__ == "__main__":
    # Small config consistent with the module: nx=32, nf=64, T=8, B=2.
    B, T, NX, NF = 2, 8, 32, 64

    key = jax.random.PRNGKey(0)
    kx, kw = jax.random.split(key, 2)

    x = jax.random.normal(kx, (B, T, NX), dtype=jnp.float32)
    # Conv1D init: w ~ N(0, 0.02), b = 0
    w = 0.02 * jax.random.normal(kw, (NX, NF), dtype=jnp.float32)
    b = jnp.zeros((NF,), dtype=jnp.float32)

    # --- f32 path (matches the PyTorch module) ------------------------------
    out = conv1d_forward(x, w, b)
    out = jax.block_until_ready(out)
    ref = conv1d_reference(x, w, b)
    assert out.shape == (B, T, NF)
    assert jnp.allclose(out, ref, atol=1e-5, rtol=1e-5), "f32 mismatch vs reference"

    # --- bf16 operands straight into the MXU (f32 accumulation) -------------
    xb = x.astype(jnp.bfloat16)
    wb = w.astype(jnp.bfloat16)
    out_bf16 = jax.block_until_ready(conv1d_forward(xb, wb, b.astype(jnp.bfloat16)))
    assert out_bf16.dtype == jnp.bfloat16
    assert jnp.allclose(
        out_bf16.astype(jnp.float32), ref, atol=5e-2, rtol=1e-1
    ), "bf16 mismatch vs reference"

    # TODO(synk): rf != 1 raises NotImplementedError in the original module;
    # not implemented here either.
    print("KERNEL_OK")
</pallas_src>

<mosaic_0001>
module attributes {stable_mosaic.version = 11 : i64} {
  func.func @_addmm_kernel_f32(%arg0: i32, %arg1: i32, %arg2: i32, %arg3: memref<8x128xf32, #tpu.memory_space<vmem>>, %arg4: memref<128x128xf32, #tpu.memory_space<vmem>>, %arg5: memref<1x128xf32, #tpu.memory_space<vmem>>, %arg6: memref<8x128xf32, #tpu.memory_space<vmem>>) attributes {dimension_semantics = [#tpu.dimension_semantics<parallel>, #tpu.dimension_semantics<parallel>, #tpu.dimension_semantics<arbitrary>], iteration_bounds = array<i64: 2, 1, 1>, scalar_prefetch = 0 : i64, scratch_operands = 0 : i64, tpu.core_type = #tpu.core_type<tc>, window_params = [{transform_indices = @transform_0, window_bounds = array<i64: 8, 128>}, {transform_indices = @transform_1, window_bounds = array<i64: 128, 128>}, {transform_indices = @transform_2, window_bounds = array<i64: 1, 128>}, {transform_indices = @transform_3, window_bounds = array<i64: 8, 128>}]} {
    %c0_i32 = arith.constant 0 : i32
    %0 = arith.cmpi eq, %arg2, %c0_i32 : i32
    %1 = arith.extui %0 : i1 to i32
    %c0_i32_0 = arith.constant 0 : i32
    %2 = arith.cmpi ne, %1, %c0_i32_0 : i32
    scf.if %2 {
      %cst_10 = arith.constant 0.000000e+00 : f32
      %12 = vector.broadcast %cst_10 : f32 to vector<8x128xf32>
      %c0_11 = arith.constant 0 : index
      %c0_12 = arith.constant 0 : index
      %13 = vector.load %arg6[%c0_11, %c0_12] : memref<8x128xf32, #tpu.memory_space<vmem>>, vector<8x128xf32>
      tpu.vector_store %arg6[%c0_11, %c0_12], %12 {strides = array<i32>} : memref<8x128xf32, #tpu.memory_space<vmem>>, vector<8x128xf32>,
    } else {
    }
    %c0 = arith.constant 0 : index
    %c0_1 = arith.constant 0 : index
    %3 = vector.load %arg6[%c0, %c0_1] : memref<8x128xf32, #tpu.memory_space<vmem>>, vector<8x128xf32>
    %c0_2 = arith.constant 0 : index
    %c0_3 = arith.constant 0 : index
    %4 = vector.load %arg3[%c0_2, %c0_3] : memref<8x128xf32, #tpu.memory_space<vmem>>, vector<8x128xf32>
    %c0_4 = arith.constant 0 : index
    %c0_5 = arith.constant 0 : index
    %5 = vector.load %arg4[%c0_4, %c0_5] : memref<128x128xf32, #tpu.memory_space<vmem>>, vector<128x128xf32>
    %cst = arith.constant dense<0.000000e+00> : vector<8x128xf32>
    %6 = tpu.matmul %4, %5, %cst {dimension_numbers = #tpu.dot_dimension_numbers<[1], [0], [0], [1], [0, 0, 1, 1], [], []>} : vector<8x128xf32>, vector<128x128xf32>, vector<8x128xf32> -> vector<8x128xf32>
    %7 = arith.addf %3, %6 : vector<8x128xf32>
    %c0_6 = arith.constant 0 : index
    %c0_7 = arith.constant 0 : index
    %8 = vector.load %arg6[%c0_6, %c0_7] : memref<8x128xf32, #tpu.memory_space<vmem>>, vector<8x128xf32>
    tpu.vector_store %arg6[%c0_6, %c0_7], %7 {strides = array<i32>} : memref<8x128xf32, #tpu.memory_space<vmem>>, vector<8x128xf32>,
    %c0_i32_8 = arith.constant 0 : i32
    %9 = arith.cmpi eq, %arg2, %c0_i32_8 : i32
    %10 = arith.extui %9 : i1 to i32
    %c0_i32_9 = arith.constant 0 : i32
    %11 = arith.cmpi ne, %10, %c0_i32_9 : i32
    scf.if %11 {
      %c0_10 = arith.constant 0 : index
      %c0_11 = arith.constant 0 : index
      %12 = vector.load %arg6[%c0_10, %c0_11] : memref<8x128xf32, #tpu.memory_space<vmem>>, vector<8x128xf32>
      %c0_12 = arith.constant 0 : index
      %c0_13 = arith.constant 0 : index
      %13 = vector.load %arg5[%c0_12, %c0_13] : memref<1x128xf32, #tpu.memory_space<vmem>>, vector<1x128xf32>
      %14 = vector.broadcast %13 : vector<1x128xf32> to vector<8x128xf32>
      %15 = arith.addf %12, %14 : vector<8x128xf32>
      %c0_14 = arith.constant 0 : index
      %c0_15 = arith.constant 0 : index
      %16 = vector.load %arg6[%c0_14, %c0_15] : memref<8x128xf32, #tpu.memory_space<vmem>>, vector<8x128xf32>
      tpu.vector_store %arg6[%c0_14, %c0_15], %15 {strides = array<i32>} : memref<8x128xf32, #tpu.memory_space<vmem>>, vector<8x128xf32>,
    } else {
    }
    return
  }
  func.func @transform_0(%arg0: i32, %arg1: i32, %arg2: i32) -> (i32, i32) {
    %c0_i32 = arith.constant 0 : i32
    return %arg0, %arg2 : i32, i32
  }
  func.func @transform_1(%arg0: i32, %arg1: i32, %arg2: i32) -> (i32, i32) {
    %c0_i32 = arith.constant 0 : i32
    return %arg2, %arg1 : i32, i32
  }
  func.func @transform_2(%arg0: i32, %arg1: i32, %arg2: i32) -> (i32, i32) {
    %c0_i32 = arith.constant 0 : i32
    %c0_i32_0 = arith.constant 0 : i32
    return %c0_i32, %arg1 : i32, i32
  }
  func.func @transform_3(%arg0: i32, %arg1: i32, %arg2: i32) -> (i32, i32) {
    %c0_i32 = arith.constant 0 : i32
    return %arg0, %arg1 : i32, i32
  }
}

</mosaic_0001>

<llo_original>
// kernel: conv1d_forward.1
$region0: #{conv1d_forward.1}
  #allocation0 [shape = 'u32[]', space=smem, size = 0x4, offset = 0x4, fixed_abs, tag = 'smem constant byte address 0x4 - core index']
  #allocation1 [shape = 'u32[72,128]{1,0:T(1,128)}', space=vmem, size = 0x9000, scoped, tag = 'internal scratch']
  %s0 = inlined_call_operand.vmem [shape: f32[16,128], index: 0, kind: input, shape index: {}]
  %s1 = inlined_call_operand.vmem [shape: f32[128,128], index: 1, kind: input, shape index: {}]
  %s2 = inlined_call_operand.vmem [shape: f32[1,128], index: 2, kind: input, shape index: {}]
  %s3 = inlined_call_operand.vmem [shape: f32[16,128], index: 3, kind: output, shape index: {}]
  %s4 = sld [smem:[#allocation0]]
  $region53: #{conv1d_forward.1} parent=0
    _
  %s6 = ssub.s32 1, %s4
  %s7 = scalar_select 0, %s6, %s4
  loop: start=0, step=1, limit=4
  $region2: #{conv1d_forward.1} parent=0 // loop_pre_header
    _
  $region3: #{conv1d_forward.1} parent=0 // loop_header
    %s9 = sphi 0, %s13
    %p10 = scmp.ge.s32.totalorder %s9, 4
    %s16 = sphi 0, %s35
    %s17 = sphi 0, %s31
    %s18 = sphi 0, %s27
    %s19 = sphi 0, %s16
    %s20 = sphi 0, %s17
    %s21 = sphi 0, %s18
    %s22 = sphi 0, %s19
    %s23 = sphi 0, %s20
    %s24 = sphi 0, %s21
    %s40 = sphi 0, %s42
    %s43 = sphi 0, %s40
    %s44 = sphi 0, %s43
    %s60 = sphi 0, %s44
    %s68 = sphi 0, %s70
    %s71 = sphi 0, %s68
    %s72 = sphi 0, %s71
    %s88 = sphi 0, %s72
    %s94 = sphi 0, %s96
    %s97 = sphi 0, %s94
    %s98 = sphi 0, %s97
    %s114 = sphi 0, %s98
    %s122 = sphi 0, %s124
    %s125 = sphi 0, %s122
    %s126 = sphi 0, %s125
    %s142 = sphi 0, %s126
  $region4: #{conv1d_forward.1} parent=0 // loop_header_branch
    %12 = sbr.rel (%p10) target = $region8
  $region5: #{conv1d_forward.1} parent=0 // loop_body
    %s14 = ssub.s32 %s9, 1
    %s15 = ssub.s32 %s9, 2
    %s25 = sadd.s32 1, %s18
    %p26 = scmp.ge.s32.totalorder %s25, 1
    %s27 = scalar_select %p26, 0, %s25
    %s28 = sadd.s32 1, %s17
    %s29 = scalar_select %p26, %s28, %s17
    %p30 = scmp.ge.s32.totalorder %s29, 1
    %s31 = scalar_select %p30, 0, %s29
    %s32 = sadd.s32 1, %s16
    %s33 = scalar_select %p30, %s32, %s16
    %p34 = scmp.ge.s32.totalorder %s33, 2
    %s35 = scalar_select %p34, 0, %s33
    %s36 = ssub.s32 %s16, %s35
    %s37 = ssub.s32 %s18, %s27
    %s38 = sor.u32 %s36, %s37
    %p39 = scmp.eq.s32.totalorder %s38, 0
    %s41 = sadd.s32 %s40, 1
    %s42 = scalar_select %p39, %s40, %s41
    %p45 = pneg %p39
    %p46 = scmp.eq.s32.totalorder %s9, 1
    %p47 = por %p45, %p46
    %p48 = scmp.ne.s32.totalorder %s40, %s43
    %p49 = scmp.eq.s32.totalorder %s9, 0
    %p50 = por %p48, %p49
    %p51 = scmp.ne.s32.totalorder %s40, %s43
    %p52 = scmp.eq.s32.totalorder %s14, 1
    %p53 = por %p51, %p52
    %p54 = scmp.ne.s32.totalorder %s43, %s44
    %p55 = scmp.eq.s32.totalorder %s14, 0
    %p56 = por %p54, %p55
    %p57 = scmp.ne.s32.totalorder %s43, %s44
    %p58 = scmp.eq.s32.totalorder %s15, 1
    %p59 = por %p57, %p58
    %p61 = scmp.ne.s32.totalorder %s44, %s60
    %p62 = scmp.eq.s32.totalorder %s15, 0
    %p63 = por %p61, %p62
    %s64 = ssub.s32 %s18, %s27
    %s65 = ssub.s32 %s17, %s31
    %s66 = sor.u32 %s64, %s65
    %p67 = scmp.eq.s32.totalorder %s66, 0
    %s69 = sadd.s32 %s68, 1
    %s70 = scalar_select %p67, %s68, %s69
    %p73 = pneg %p67
    %p74 = scmp.eq.s32.totalorder %s9, 1
    %p75 = por %p73, %p74
    %p76 = scmp.ne.s32.totalorder %s68, %s71
    %p77 = scmp.eq.s32.totalorder %s9, 0
    %p78 = por %p76, %p77
    %p79 = scmp.ne.s32.totalorder %s68, %s71
    %p80 = scmp.eq.s32.totalorder %s14, 1
    %p81 = por %p79, %p80
    %p82 = scmp.ne.s32.totalorder %s71, %s72
    %p83 = scmp.eq.s32.totalorder %s14, 0
    %p84 = por %p82, %p83
    %p85 = scmp.ne.s32.totalorder %s71, %s72
    %p86 = scmp.eq.s32.totalorder %s15, 1
    %p87 = por %p85, %p86
    %p89 = scmp.ne.s32.totalorder %s72, %s88
    %p90 = scmp.eq.s32.totalorder %s15, 0
    %p91 = por %p89, %p90
    %s92 = ssub.s32 %s17, %s31
    %p93 = scmp.eq.s32.totalorder %s92, 0
    %s95 = sadd.s32 %s94, 1
    %s96 = scalar_select %p93, %s94, %s95
    %p99 = pneg %p93
    %p100 = scmp.eq.s32.totalorder %s9, 1
    %p101 = por %p99, %p100
    %p102 = scmp.ne.s32.totalorder %s94, %s97
    %p103 = scmp.eq.s32.totalorder %s9, 0
    %p104 = por %p102, %p103
    %p105 = scmp.ne.s32.totalorder %s94, %s97
    %p106 = scmp.eq.s32.totalorder %s14, 1
    %p107 = por %p105, %p106
    %p108 = scmp.ne.s32.totalorder %s97, %s98
    %p109 = scmp.eq.s32.totalorder %s14, 0
    %p110 = por %p108, %p109
    %p111 = scmp.ne.s32.totalorder %s97, %s98
    %p112 = scmp.eq.s32.totalorder %s15, 1
    %p113 = por %p111, %p112
    %p115 = scmp.ne.s32.totalorder %s98, %s114
    %p116 = scmp.eq.s32.totalorder %s15, 0
    %p117 = por %p115, %p116
    %s118 = ssub.s32 %s16, %s35
    %s119 = ssub.s32 %s17, %s31
    %s120 = sor.u32 %s118, %s119
    %p121 = scmp.eq.s32.totalorder %s120, 0
    %s123 = sadd.s32 %s122, 1
    %s124 = scalar_select %p121, %s122, %s123
    %p127 = pneg %p121
    %p128 = scmp.eq.s32.totalorder %s9, 1
    %p129 = por %p127, %p128
    %p130 = scmp.ne.s32.totalorder %s122, %s125
    %p131 = scmp.eq.s32.totalorder %s9, 0
    %p132 = por %p130, %p131
    %p133 = scmp.ne.s32.totalorder %s122, %s125
    %p134 = scmp.eq.s32.totalorder %s14, 1
    %p135 = por %p133, %p134
    %p136 = scmp.ne.s32.totalorder %s125, %s126
    %p137 = scmp.eq.s32.totalorder %s14, 0
    %p138 = por %p136, %p137
    %p139 = scmp.ne.s32.totalorder %s125, %s126
    %p140 = scmp.eq.s32.totalorder %s15, 1
    %p141 = por %p139, %p140
    %p143 = scmp.ne.s32.totalorder %s126, %s142
    %p144 = scmp.eq.s32.totalorder %s15, 0
    %p145 = por %p143, %p144
    %p146 = scmp.le.s32.totalorder 1, %s9
    %p147 = scmp.lt.s32.totalorder %s9, 3
    %p148 = pnand %p146, %p147
    %p149 = pneg %p148
    // Predicated region
    $region9: #{conv1d_forward.1} parent=5 // pred_check
      _
    $region10: #{conv1d_forward.1} parent=5 // pred_check_branch
      %151 = sbr.rel (%p148) target = $region12
    $region11: #{conv1d_forward.1} parent=5 // pred_region
      %s152 = ssub.s32 %s9, 1
      // Predicated region
      $region13: #{conv1d_forward.1} parent=11 // pred_check
        %p153 = pneg %p84
      $region14: #{conv1d_forward.1} parent=11 // pred_check_branch
        %155 = sbr.rel (%p153) target = $region16
      $region15: #{conv1d_forward.1} parent=11 // pred_region
        %s156 = smul.u32 16, %s21
        %p157 = scmp.lt.s32.totalorder %s156, 15
        %s158 = scalar_select %p157, %s156, 15
        %p159 = scmp.lt.s32.totalorder %s20, 0
        %s160 = scalar_select %p159, %s20, 0
        %s161 = sadd.s32 %s160, %s158
        %s162 = smul.addr %s161, 8
        %s163 = scalar_lea.vmem %s1, %s162
        %s164 = smul.u32 16, %s21
      $region16: #{conv1d_forward.1} parent=11 // pred_fallthru
        _
      // Predicated region
      $region17: #{conv1d_forward.1} parent=11 // pred_check
        %p165 = pneg %p110
      $region18: #{conv1d_forward.1} parent=11 // pred_check_branch
        %167 = sbr.rel (%p165) target = $region20
      $region19: #{conv1d_forward.1} parent=11 // pred_region
        %p168 = scmp.lt.s32.totalorder %s20, 0
        %s169 = scalar_select %p168, %s20, 0
        %s170 = scalar_lea.vmem %s2, %s169
      $region20: #{conv1d_forward.1} parent=11 // pred_fallthru
        _
    $region12: #{conv1d_forward.1} parent=5 // pred_fallthru
      _
    %p171 = scmp.lt.s32.totalorder %s9, 2
    // Predicated region
    $region21: #{conv1d_forward.1} parent=5 // pred_check
      %p172 = pneg %p171
    $region22: #{conv1d_forward.1} parent=5 // pred_check_branch
      %174 = sbr.rel (%p172) target = $region24
    $region23: #{conv1d_forward.1} parent=5 // pred_region
      // Predicated region
      $region25: #{conv1d_forward.1} parent=23 // pred_check
        %p175 = pneg %p50
      $region26: #{conv1d_forward.1} parent=23 // pred_check_branch
        %177 = sbr.rel (%p175) target = $region28
      $region27: #{conv1d_forward.1} parent=23 // pred_region
        %p178 = scmp.lt.s32.totalorder %s16, 1
        %s179 = scalar_select %p178, %s16, 1
        %p180 = scmp.lt.s32.totalorder %s18, 0
        %s181 = scalar_select %p180, %s18, 0
        %s182 = sadd.s32 %s181, %s179
        %s183 = smul.addr %s182, 8
        %s184 = scalar_lea.vmem %s0, %s183
      $region28: #{conv1d_forward.1} parent=23 // pred_fallthru
        _
    $region24: #{conv1d_forward.1} parent=5 // pred_fallthru
      _
    %p185 = scmp.le.s32.totalorder 1, %s9
    %p186 = scmp.lt.s32.totalorder %s9, 3
    %p187 = pnand %p185, %p186
    %p188 = pneg %p187
    // Predicated region
    $region29: #{conv1d_forward.1} parent=5 // pred_check
      _
    $region30: #{conv1d_forward.1} parent=5 // pred_check_branch
      %190 = sbr.rel (%p187) target = $region32
    $region31: #{conv1d_forward.1} parent=5 // pred_region
      %s191 = ssub.s32 %s9, 1
      %p192 = scmp.lt.s32.totalorder %s19, 1
      %s193 = scalar_select %p192, %s19, 1
      %p194 = scmp.lt.s32.totalorder %s21, 0
      %s195 = scalar_select %p194, %s21, 0
      %s196 = sadd.s32 %s195, %s193
      %s197 = smul.addr %s196, 8
      %s198 = scalar_lea.vmem %s0, %s197
      %p199 = pneg %p56
      %p200 = pneg %p53
      %s201 = smul.u32 16, %s21
      %p202 = scmp.lt.s32.totalorder %s201, 15
      %s203 = scalar_select %p202, %s201, 15
      %p204 = scmp.lt.s32.totalorder %s20, 0
      %s205 = scalar_select %p204, %s20, 0
      %s206 = sadd.s32 %s205, %s203
      %s207 = smul.addr %s206, 8
      %s208 = scalar_lea.vmem %s1, %s207
      %p209 = pneg %p84
      %p210 = pneg %p81
      %p211 = scmp.lt.s32.totalorder %s20, 0
      %s212 = scalar_select %p211, %s20, 0
      %s213 = scalar_lea.vmem %s2, %s212
      %p214 = pneg %p110
      %p215 = pneg %p107
      %p216 = pneg %p138
      %p217 = pneg %p135
      %p218 = scmp.lt.s32.totalorder %s19, 1
      %s219 = scalar_select %p218, %s19, 1
      %p220 = scmp.lt.s32.totalorder %s20, 0
      %s221 = scalar_select %p220, %s20, 0
      %s222 = sadd.s32 %s221, %s219
      %s223 = smul.addr %s222, 8
      %s224 = scalar_lea.vmem %s3, %s223
      %p225 = scmp.lt.s32.totalorder %s19, 1
      %s226 = scalar_select %p225, %s19, 1
      %p227 = scmp.lt.s32.totalorder %s21, 0
      %s228 = scalar_select %p227, %s21, 0
      %s229 = sadd.s32 %s228, %s226
      %s230 = smul.addr %s229, 8
      %s231 = scalar_lea.vmem %s0, %s230
      %s232 = smul.u32 16, %s21
      %p233 = scmp.lt.s32.totalorder %s232, 15
      %s234 = scalar_select %p233, %s232, 15
      %p235 = scmp.lt.s32.totalorder %s20, 0
      %s236 = scalar_select %p235, %s20, 0
      %s237 = sadd.s32 %s236, %s234
      %s238 = smul.addr %s237, 8
      %s239 = scalar_lea.vmem %s1, %s238
      %s240 = smul.u32 16, %s21
      %p241 = scmp.lt.s32.totalorder %s20, 0
      %s242 = scalar_select %p241, %s20, 0
      %s243 = scalar_lea.vmem %s2, %s242
      %p244 = scmp.lt.s32.totalorder %s19, 1
      %s245 = scalar_select %p244, %s19, 1
      %p246 = scmp.lt.s32.totalorder %s20, 0
      %s247 = scalar_select %p246, %s20, 0
      %s248 = sadd.s32 %s247, %s245
      %s249 = smul.addr %s248, 8
      %s250 = scalar_lea.vmem %s3, %s249
      %p251 = scmp.eq.s32.totalorder %s21, 0
      // Predicated region
      $region33: #{conv1d_forward.1} parent=31 // pred_check
        %p252 = pneg %p251
      $region34: #{conv1d_forward.1} parent=31 // pred_check_branch
        %254 = sbr.rel (%p252) target = $region36
      $region35: #{conv1d_forward.1} parent=31 // pred_region
        %255 = vst [vmem:[%s250] sm:$0xff] 0.0
      $region36: #{conv1d_forward.1} parent=31 // pred_fallthru
        _
      %v256 = vld [vmem:[%s250] sm:$0xff]
      %v257 = vld [vmem:[%s231] sm:$0xff]
      %v258 = vld [vmem:[%s239] sm:$0xff]
      %v259 = vld [vmem:[%s239 + $0x8] sm:$0xff]
      %v260 = vld [vmem:[%s239 + $0x10] sm:$0xff]
      %v261 = vld [vmem:[%s239 + $0x18] sm:$0xff]
      %v262 = vld [vmem:[%s239 + $0x20] sm:$0xff]
      %v263 = vld [vmem:[%s239 + $0x28] sm:$0xff]
      %v264 = vld [vmem:[%s239 + $0x30] sm:$0xff]
      %v265 = vld [vmem:[%s239 + $0x38] sm:$0xff]
      %v266 = vld [vmem:[%s239 + $0x40] sm:$0xff]
      %v267 = vld [vmem:[%s239 + $0x48] sm:$0xff]
      %v268 = vld [vmem:[%s239 + $0x50] sm:$0xff]
      %v269 = vld [vmem:[%s239 + $0x58] sm:$0xff]
      %v270 = vld [vmem:[%s239 + $0x60] sm:$0xff]
      %v271 = vld [vmem:[%s239 + $0x68] sm:$0xff]
      %v272 = vld [vmem:[%s239 + $0x70] sm:$0xff]
      %v273 = vld [vmem:[%s239 + $0x78] sm:$0xff]
      %274 = vmatpush.msra.mxu0 %v273
      %275 = vmatpush.msra.mxu0 %v272
      %276 = vmatpush.msra.mxu0 %v271
      %277 = vmatpush.msra.mxu0 %v270
      %278 = vmatpush.msra.mxu0 %v269
      %279 = vmatpush.msra.mxu0 %v268
      %280 = vmatpush.msra.mxu0 %v267
      %281 = vmatpush.msra.mxu0 %v266
      %282 = vmatpush.msra.mxu0 %v265
      %283 = vmatpush.msra.mxu0 %v264
      %284 = vmatpush.msra.mxu0 %v263
      %285 = vmatpush.msra.mxu0 %v262
      %286 = vmatpush.msra.mxu0 %v261
      %287 = vmatpush.msra.mxu0 %v260
      %288 = vmatpush.msra.mxu0 %v259
      %289 = vmatpush.msra.mxu0 %v258
      %290 = vmatmul.f32.gmra.mxu0 %v257
      %v291 = vpop.f32.mrf.mxu0
      %v292 = vadd.f32 0.0, %v291
      %293 = vdwg.mxu0
      %v294 = vadd.f32 %v256, %v292
      %295 = vst [vmem:[%s250] sm:$0xff] %v294
      // Predicated region
      $region37: #{conv1d_forward.1} parent=31 // pred_check
        %p296 = pneg %p251
      $region38: #{conv1d_forward.1} parent=31 // pred_check_branch
        %298 = sbr.rel (%p296) target = $region40
      $region39: #{conv1d_forward.1} parent=31 // pred_region
        %v299 = vld [vmem:[%s250] sm:$0xff]
        %v300 = vld [vmem:[%s243] sm:$0x1]
        %v302 = vperm.slane %v300, 0
        %v304 = vadd.f32 %v299, %v302
        %305 = vst [vmem:[%s250] sm:$0xff] %v304
      $region40: #{conv1d_forward.1} parent=31 // pred_fallthru
        _
      %p306 = scmp.lt.s32.totalorder %s19, 1
      %s307 = scalar_select %p306, %s19, 1
      %p308 = scmp.lt.s32.totalorder %s20, 0
      %s309 = scalar_select %p308, %s20, 0
      %s310 = sadd.s32 %s309, %s307
      %s311 = smul.addr %s310, 8
      %s312 = scalar_lea.vmem %s3, %s311
      // Predicated region
      $region41: #{conv1d_forward.1} parent=31 // pred_check
        %p313 = pneg %p135
      $region42: #{conv1d_forward.1} parent=31 // pred_check_branch
        %315 = sbr.rel (%p313) target = $region44
      $region43: #{conv1d_forward.1} parent=31 // pred_region
        _
      $region44: #{conv1d_forward.1} parent=31 // pred_fallthru
        _
    $region32: #{conv1d_forward.1} parent=5 // pred_fallthru
      _
    %p316 = scmp.le.s32.totalorder 2, %s9
    // Predicated region
    $region45: #{conv1d_forward.1} parent=5 // pred_check
      %p317 = pneg %p316
    $region46: #{conv1d_forward.1} parent=5 // pred_check_branch
      %319 = sbr.rel (%p317) target = $region48
    $region47: #{conv1d_forward.1} parent=5 // pred_region
      %s320 = ssub.s32 %s9, 2
      // Predicated region
      $region49: #{conv1d_forward.1} parent=47 // pred_check
        %p321 = pneg %p141
      $region50: #{conv1d_forward.1} parent=47 // pred_check_branch
        %323 = sbr.rel (%p321) target = $region52
      $region51: #{conv1d_forward.1} parent=47 // pred_region
        %p324 = scmp.lt.s32.totalorder %s22, 1
        %s325 = scalar_select %p324, %s22, 1
        %p326 = scmp.lt.s32.totalorder %s23, 0
        %s327 = scalar_select %p326, %s23, 0
        %s328 = sadd.s32 %s327, %s325
        %s329 = smul.addr %s328, 8
        %s330 = scalar_lea.vmem %s3, %s329
      $region52: #{conv1d_forward.1} parent=47 // pred_fallthru
        _
    $region48: #{conv1d_forward.1} parent=5 // pred_fallthru
      _
  $region6: #{conv1d_forward.1} parent=0 // loop_footer
    %s13 = sadd.s32 1, %s9
  $region7: #{conv1d_forward.1} parent=0 // loop_footer_branch
    %8 = sbr.rel target = $region3
  $region8: #{conv1d_forward.1} parent=0 // loop_exit
    _

</llo_original>
